<compile_context>
chip_gen: v7x
topology: tpu7x:2x2x1
jax: 0.10.0
libtpu: 0.0.40
codegen_flags: <defaults>
</compile_context>

<pallas_src>
import jax
import jax.numpy as jnp
from jax.experimental import pallas as pl
from jax.experimental.pallas import tpu as pltpu


def _identity_copy_kernel(x_ref, o_ref):
    # Straight VMEM tile copy; no extra elementwise work so the single
    # vector-store slot (v5e) is spent only on the store itself.
    o_ref[...] = x_ref[...]


# ~4 MiB per tile => 2 buffers x (in + out) ~= 16 MiB peak, under scoped VMEM
# defaults on every supported chip.
_TILE_BYTES_TARGET = 4 << 20


def empty_transformation(img: jnp.ndarray) -> jnp.ndarray:
    """Pallas implementation of EmptyTransformation.forward (identity)."""
    total = int(img.size)
    itemsize = jnp.dtype(img.dtype).itemsize

    if total == 0:
        return img

    # Widest lane-dense last dim (multiple of 128) dividing the element count
    # exactly, so no padding or masked stores are needed.
    lane = next(
        (c for c in (8192, 4096, 2048, 1024, 512, 256, 128) if total % c == 0),
        None,
    )
    if lane is None:
        # Identity requires no compute; skip the copy rather than paying for a
        # padded / masked layout.
        return img

    rows = total // lane
    budget_rows = max(1, _TILE_BYTES_TARGET // (lane * itemsize))

    if rows <= budget_rows:
        # Whole array in one fat tile: block_shape equals the full array dims,
        # which always satisfies the (8, 128) tiling constraint.
        tile_rows = rows
    else:
        # Largest multiple of 8 within budget that divides rows evenly, so
        # every block is full-sized and (8, 128)-aligned.
        tile_rows = None
        for t in range((budget_rows // 8) * 8, 0, -8):
            if rows % t == 0:
                tile_rows = t
                break
        if tile_rows is None:
            # Awkward row count: identity never needs a copy, just return it.
            return img

    grid = (rows // tile_rows,)
    x2d = img.reshape(rows, lane)
    spec = pl.BlockSpec((tile_rows, lane), lambda i: (i, 0))

    out2d = pl.pallas_call(
        _identity_copy_kernel,
        out_shape=jax.ShapeDtypeStruct((rows, lane), img.dtype),
        grid_spec=pl.GridSpec(grid=grid, in_specs=[spec], out_specs=spec),
        compiler_params=pltpu.CompilerParams(
            dimension_semantics=("parallel",),
        ),
    )(x2d)
    return out2d.reshape(img.shape)


if __name__ == "__main__":
    key = jax.random.PRNGKey(0)
    x = jax.random.normal(key, (2, 4, 16, 16), dtype=jnp.float32)

    y = empty_transformation(x)
    jax.block_until_ready(y)

    assert y.shape == x.shape and y.dtype == x.dtype
    assert bool(jnp.all(y == x))
    print("KERNEL_OK")
</pallas_src>

<mosaic_0001>
module attributes {stable_mosaic.version = 11 : i64} {
  func.func @_identity_copy_kernel(%arg0: i32, %arg1: memref<1x2048xf32, #tpu.memory_space<vmem>>, %arg2: memref<1x2048xf32, #tpu.memory_space<vmem>>) attributes {dimension_semantics = [#tpu.dimension_semantics<parallel>], iteration_bounds = array<i64: 1>, scalar_prefetch = 0 : i64, scratch_operands = 0 : i64, tpu.core_type = #tpu.core_type<tc>, window_params = [{transform_indices = @transform_0, window_bounds = array<i64: 1, 2048>}, {transform_indices = @transform_1, window_bounds = array<i64: 1, 2048>}]} {
    %c0 = arith.constant 0 : index
    %c0_0 = arith.constant 0 : index
    %0 = vector.load %arg1[%c0, %c0_0] : memref<1x2048xf32, #tpu.memory_space<vmem>>, vector<1x2048xf32>
    %c0_1 = arith.constant 0 : index
    %c0_2 = arith.constant 0 : index
    %1 = vector.load %arg2[%c0_1, %c0_2] : memref<1x2048xf32, #tpu.memory_space<vmem>>, vector<1x2048xf32>
    tpu.vector_store %arg2[%c0_1, %c0_2], %0 {strides = array<i32>} : memref<1x2048xf32, #tpu.memory_space<vmem>>, vector<1x2048xf32>,
    return
  }
  func.func @transform_0(%arg0: i32) -> (i32, i32) {
    %c0_i32 = arith.constant 0 : i32
    %c0_i32_0 = arith.constant 0 : i32
    return %arg0, %c0_i32 : i32, i32
  }
  func.func @transform_1(%arg0: i32) -> (i32, i32) {
    %c0_i32 = arith.constant 0 : i32
    %c0_i32_0 = arith.constant 0 : i32
    return %arg0, %c0_i32 : i32, i32
  }
}

</mosaic_0001>

<llo_original>
// kernel: tpu_custom_call.1
$region0: #{tpu_custom_call.1}
  #allocation0 [shape = 'u32[]', space=smem, size = 0x4, offset = 0x4, fixed_abs, tag = 'smem constant byte address 0x4 - core index']
  #allocation1 [shape = 'u32[144,128]{1,0:T(1,128)}', space=vmem, size = 0x12000, scoped, tag = 'internal scratch']
  %s0 = inlined_call_operand.hbm [shape: f32[1,2048], index: 0, kind: input, shape index: {}]
  %s1 = inlined_call_operand.hbm [shape: f32[1,2048], index: 1, kind: output, shape index: {}]
  %s2 = sld [smem:[#allocation0]]
  $region18: #{tpu_custom_call.1} parent=0
    _
  %s4 = ssub.s32 1, %s2
  %s5 = scalar_select 0, %s4, %s2
  $region1: #{tpu_custom_call.1} parent=0
    #allocation2 [shape = 'u8[8192]{0}', space=vmem, size = 0x2000, scoped, tag = 'input window, operand 0, single buffered']
    #allocation3 [shape = 's32[1]{0}', space=sflag, size = 0x4, scoped, tag = 'scoped memory for tpu_custom_call.1']
    #allocation4 [shape = 's32[1]{0}', space=sflag, size = 0x4, scoped, tag = 'scoped memory for tpu_custom_call.1']
    #allocation5 [shape = 'u8[8192]{0}', space=vmem, size = 0x2000, scoped, tag = 'output window, operand 0, single buffered']
    %6 = vsyncpa [#allocation3], 0
    %7 = vsyncpa [#allocation4], 0
    // Predicated region
    $region2: #{tpu_custom_call.1} parent=1 // pred_check
      _
    $region3: #{tpu_custom_call.1} parent=1 // pred_check_branch
      %9 = sbr.rel (0) target = $region5
    $region4: #{tpu_custom_call.1} parent=1 // pred_region
      %s11 = ssub.s32 256, 256
      %12 = vsyncadd [#allocation3], %s11
      %s14 = sshll.u32 [#allocation2], 4
      %s15 = int_to_ptr.vmem [resolvable:$true] %s14
      %17 = dma.hbm_to_vmem [thread:$0]  %s0, 256, %s15, [#allocation3]
    $region5: #{tpu_custom_call.1} parent=1 // pred_fallthru
      _
    // Predicated region
    $region6: #{tpu_custom_call.1} parent=1 // pred_check
      _
    $region7: #{tpu_custom_call.1} parent=1 // pred_check_branch
      %19 = sbr.rel (0) target = $region9
    $region8: #{tpu_custom_call.1} parent=1 // pred_region
      %20 = dma.done [#allocation3], 256
    $region9: #{tpu_custom_call.1} parent=1 // pred_fallthru
      _
    %v21 = vld [vmem:[#allocation2] sm:$0xff]
    %v22 = vld [vmem:[#allocation2 + $0x8] sm:$0xff]
    %23 = vst [vmem:[#allocation5] sm:$0xff] %v21
    %24 = vst [vmem:[#allocation5 + $0x8] sm:$0xff] %v22
    // Predicated region
    $region10: #{tpu_custom_call.1} parent=1 // pred_check
      _
    $region11: #{tpu_custom_call.1} parent=1 // pred_check_branch
      %26 = sbr.rel (0) target = $region13
    $region12: #{tpu_custom_call.1} parent=1 // pred_region
      %s28 = ssub.s32 256, 256
      %29 = vsyncadd [#allocation4], %s28
      %s31 = sshll.u32 [#allocation5], 4
      %s32 = int_to_ptr.vmem [resolvable:$true] %s31
      %34 = dma.vmem_to_hbm [thread:$0]  %s32, 256, %s1, [#allocation4]
    $region13: #{tpu_custom_call.1} parent=1 // pred_fallthru
      _
    // Predicated region
    $region14: #{tpu_custom_call.1} parent=1 // pred_check
      _
    $region15: #{tpu_custom_call.1} parent=1 // pred_check_branch
      %36 = sbr.rel (0) target = $region17
    $region16: #{tpu_custom_call.1} parent=1 // pred_region
      %37 = dma.done [#allocation4], 256
    $region17: #{tpu_custom_call.1} parent=1 // pred_fallthru
      _
    %38 = vsyncpa [#allocation3], 1
    %39 = vsyncpa [#allocation4], 1

</llo_original>
